<compile_context>
chip_gen: v7x
topology: tpu7x:2x2x1
jax: 0.10.0
libtpu: 0.0.40
codegen_flags: <defaults>
</compile_context>

<pallas_src>
import math

import jax
import jax.numpy as jnp
from jax.experimental import pallas as pl
from jax.experimental.pallas import tpu as pltpu


def _token_embedding_kernel(x_ref, w_ref, o_ref):
    """One (batch row, d_model tile) step of the 3-tap circular conv.

    x_ref: (S, F)      full sequence of one batch element (circular halo stays in-block)
    w_ref: (3, F, TD)  conv taps, already in (tap, in_features, d_model_tile) layout
    o_ref: (S, TD)     lane-dense output tile (TD multiple of 128, or == d_model)
    """
    x_cur = x_ref[...]
    s = x_cur.shape[0]
    # Circular +/-1 shifts along the sequence axis on the XLU (no extra HBM traffic).
    # pltpu.roll follows np.roll semantics: roll(x, k)[t] == x[(t - k) % S].
    x_prev = pltpu.roll(x_cur, shift=1, axis=0)       # row t holds x[(t - 1) % S]
    x_next = pltpu.roll(x_cur, shift=s - 1, axis=0)   # row t holds x[(t + 1) % S]

    # Three small MXU matmuls (K = features), accumulated in f32.
    # NOTE(v5e): if `features` stays tiny (<8), a VPU broadcast-FMA over the F axis would
    # avoid the MXU push/pop round trip; kept as jnp.dot for generality over F.
    acc = jnp.dot(x_prev, w_ref[0], preferred_element_type=jnp.float32)
    acc = acc + jnp.dot(x_cur, w_ref[1], preferred_element_type=jnp.float32)
    acc = acc + jnp.dot(x_next, w_ref[2], preferred_element_type=jnp.float32)
    o_ref[...] = acc.astype(o_ref.dtype)


def prepare_token_embedding_weight(conv_weight):
    """One-time, parameter-init-time layout prep (NOT per forward call).

    PyTorch Conv1d weight (d_model, features, 3) -> (3, features, d_model), so each tap
    w[k] is already in the (K=features, N=d_model) orientation the MXU consumes.
    """
    return jnp.transpose(conv_weight, (2, 1, 0))


def token_embedding(x, w_kfd):
    """Circular-conv token embedding: x (B, S, F) -> (B, S, D)."""
    b, s, f = x.shape
    k, f2, d = w_kfd.shape
    assert k == 3 and f2 == f

    # d_model tile: largest multiple of 128 (<= 512) dividing D -> lane-dense stores and a
    # bounded per-step footprint (keeps the same tiling valid on v7x's 64 MiB VMEM).
    td = math.gcd(d, 512) if d % 128 == 0 else d
    grid = (b, d // td)

    # Per-step VMEM: x(S*F) + w(3*F*TD) + out(S*TD), double-buffered -> KBs at these sizes,
    # far below the 32 MiB default scoped VMEM on v5e/v6e/v7x, so no vmem_limit override.
    # Sequence tiling (with a +/-1-row halo) would only be needed for very long S.
    cost = pl.CostEstimate(
        flops=2 * b * s * 3 * f * d,
        transcendentals=0,
        bytes_accessed=(x.size * x.dtype.itemsize
                        + w_kfd.size * w_kfd.dtype.itemsize
                        + b * s * d * x.dtype.itemsize),
    )

    return pl.pallas_call(
        _token_embedding_kernel,
        out_shape=jax.ShapeDtypeStruct((b, s, d), x.dtype),
        grid=grid,
        in_specs=[
            # Full sequence of one batch element (circular halo stays inside the block).
            pl.BlockSpec((None, s, f), lambda i, j: (i, 0, 0)),
            # All 3 taps for the current d_model tile; same block across the batch axis,
            # so it stays resident in VMEM.
            pl.BlockSpec((3, f, td), lambda i, j: (0, 0, j)),
        ],
        out_specs=pl.BlockSpec((None, s, td), lambda i, j: (i, 0, j)),
        compiler_params=pltpu.CompilerParams(
            # Both grid axes are independent: lets v7x's two TensorCores split the grid.
            dimension_semantics=("parallel", "parallel"),
        ),
        cost_estimate=cost,
    )(x, w_kfd)


if __name__ == "__main__":
    # Module config: TokenEmbedding(features=4, d_model=128); input (batch=2, seq=8, features=4).
    # d_model chosen as a 128-multiple so the output store is lane-dense (per perf review).
    features, d_model = 4, 128
    batch, seq = 2, 8

    key = jax.random.PRNGKey(0)
    kx, kw = jax.random.split(key, 2)

    x = jax.random.normal(kx, (batch, seq, features), dtype=jnp.float32)

    # Conv1d weight in PyTorch layout (out=d_model, in=features, k=3) with
    # kaiming_normal_(mode='fan_in', nonlinearity='leaky_relu') ~ N(0, gain/sqrt(fan_in)).
    fan_in = features * 3
    gain = (2.0 / (1.0 + 0.01 ** 2)) ** 0.5
    w_torch = (gain / (fan_in ** 0.5)) * jax.random.normal(
        kw, (d_model, features, 3), dtype=jnp.float32)

    # One-time parameter preparation (no per-call transpose in the hot path).
    w_kfd = prepare_token_embedding_weight(w_torch)

    y = token_embedding(x, w_kfd)
    y = jax.block_until_ready(y)

    # Plain-JAX reference of the circular Conv1d (kernel_size=3, padding=1, no bias).
    x_prev = jnp.roll(x, 1, axis=1)
    x_next = jnp.roll(x, -1, axis=1)
    ref = (x_prev @ w_torch[:, :, 0].T
           + x @ w_torch[:, :, 1].T
           + x_next @ w_torch[:, :, 2].T)

    assert y.shape == (batch, seq, d_model)
    assert jnp.allclose(y, ref, atol=1e-5, rtol=1e-5)

    print("KERNEL_OK")
</pallas_src>

<mosaic_0001>
module attributes {stable_mosaic.version = 11 : i64} {
  func.func @_token_embedding_kernel(%arg0: i32, %arg1: i32, %arg2: memref<1x8x4xf32, #tpu.memory_space<vmem>>, %arg3: memref<3x4x128xf32, #tpu.memory_space<vmem>>, %arg4: memref<1x8x128xf32, #tpu.memory_space<vmem>>) attributes {dimension_semantics = [#tpu.dimension_semantics<parallel>, #tpu.dimension_semantics<parallel>], iteration_bounds = array<i64: 2, 1>, scalar_prefetch = 0 : i64, scratch_operands = 0 : i64, tpu.core_type = #tpu.core_type<tc>, window_params = [{transform_indices = @transform_0, window_bounds = array<i64: 1, 8, 4>}, {transform_indices = @transform_1, window_bounds = array<i64: 3, 4, 128>}, {transform_indices = @transform_2, window_bounds = array<i64: 1, 8, 128>}]} {
    %c0 = arith.constant 0 : index
    %c0_0 = arith.constant 0 : index
    %c0_1 = arith.constant 0 : index
    %0 = vector.load %arg2[%c0, %c0_0, %c0_1] : memref<1x8x4xf32, #tpu.memory_space<vmem>>, vector<1x8x4xf32>
    %1 = vector.shape_cast %0 : vector<1x8x4xf32> to vector<8x4xf32>
    %c1_i32 = arith.constant 1 : i32
    %2 = tpu.dynamic_rotate %1 by %c1_i32 dim 0 : vector<8x4xf32>, i32 -> vector<8x4xf32>
    %c7_i32 = arith.constant 7 : i32
    %3 = tpu.dynamic_rotate %1 by %c7_i32 dim 0 : vector<8x4xf32>, i32 -> vector<8x4xf32>
    %c0_2 = arith.constant 0 : index
    %c0_3 = arith.constant 0 : index
    %c0_4 = arith.constant 0 : index
    %4 = vector.load %arg3[%c0_2, %c0_3, %c0_4] : memref<3x4x128xf32, #tpu.memory_space<vmem>>, vector<1x4x128xf32>
    %5 = vector.shape_cast %4 : vector<1x4x128xf32> to vector<4x128xf32>
    %cst = arith.constant dense<0.000000e+00> : vector<8x128xf32>
    %6 = tpu.matmul %2, %5, %cst {dimension_numbers = #tpu.dot_dimension_numbers<[1], [0], [0], [1], [0, 0, 1, 1], [], []>} : vector<8x4xf32>, vector<4x128xf32>, vector<8x128xf32> -> vector<8x128xf32>
    %c1 = arith.constant 1 : index
    %c0_5 = arith.constant 0 : index
    %c0_6 = arith.constant 0 : index
    %7 = vector.load %arg3[%c1, %c0_5, %c0_6] : memref<3x4x128xf32, #tpu.memory_space<vmem>>, vector<1x4x128xf32>
    %8 = vector.shape_cast %7 : vector<1x4x128xf32> to vector<4x128xf32>
    %cst_7 = arith.constant dense<0.000000e+00> : vector<8x128xf32>
    %9 = tpu.matmul %1, %8, %cst_7 {dimension_numbers = #tpu.dot_dimension_numbers<[1], [0], [0], [1], [0, 0, 1, 1], [], []>} : vector<8x4xf32>, vector<4x128xf32>, vector<8x128xf32> -> vector<8x128xf32>
    %10 = arith.addf %6, %9 : vector<8x128xf32>
    %c2 = arith.constant 2 : index
    %c0_8 = arith.constant 0 : index
    %c0_9 = arith.constant 0 : index
    %11 = vector.load %arg3[%c2, %c0_8, %c0_9] : memref<3x4x128xf32, #tpu.memory_space<vmem>>, vector<1x4x128xf32>
    %12 = vector.shape_cast %11 : vector<1x4x128xf32> to vector<4x128xf32>
    %cst_10 = arith.constant dense<0.000000e+00> : vector<8x128xf32>
    %13 = tpu.matmul %3, %12, %cst_10 {dimension_numbers = #tpu.dot_dimension_numbers<[1], [0], [0], [1], [0, 0, 1, 1], [], []>} : vector<8x4xf32>, vector<4x128xf32>, vector<8x128xf32> -> vector<8x128xf32>
    %14 = arith.addf %10, %13 : vector<8x128xf32>
    %c0_11 = arith.constant 0 : index
    %c0_12 = arith.constant 0 : index
    %c0_13 = arith.constant 0 : index
    %15 = vector.load %arg4[%c0_11, %c0_12, %c0_13] : memref<1x8x128xf32, #tpu.memory_space<vmem>>, vector<1x8x128xf32>
    %16 = vector.shape_cast %15 : vector<1x8x128xf32> to vector<8x128xf32>
    %17 = vector.shape_cast %14 : vector<8x128xf32> to vector<1x8x128xf32>
    tpu.vector_store %arg4[%c0_11, %c0_12, %c0_13], %17 {strides = array<i32>} : memref<1x8x128xf32, #tpu.memory_space<vmem>>, vector<1x8x128xf32>,
    return
  }
  func.func @transform_0(%arg0: i32, %arg1: i32) -> (i32, i32, i32) {
    %c0_i32 = arith.constant 0 : i32
    %c0_i32_0 = arith.constant 0 : i32
    %c0_i32_1 = arith.constant 0 : i32
    return %arg0, %c0_i32, %c0_i32_0 : i32, i32, i32
  }
  func.func @transform_1(%arg0: i32, %arg1: i32) -> (i32, i32, i32) {
    %c0_i32 = arith.constant 0 : i32
    %c0_i32_0 = arith.constant 0 : i32
    %c0_i32_1 = arith.constant 0 : i32
    return %c0_i32, %c0_i32_0, %arg1 : i32, i32, i32
  }
  func.func @transform_2(%arg0: i32, %arg1: i32) -> (i32, i32, i32) {
    %c0_i32 = arith.constant 0 : i32
    %c0_i32_0 = arith.constant 0 : i32
    return %arg0, %c0_i32, %arg1 : i32, i32, i32
  }
}

</mosaic_0001>

<llo_original>
// kernel: tpu_custom_call.1
$region0: #{tpu_custom_call.1}
  #allocation0 [shape = 'u32[]', space=smem, size = 0x4, offset = 0x4, fixed_abs, tag = 'smem constant byte address 0x4 - core index']
  #allocation1 [shape = 'u32[144,128]{1,0:T(1,128)}', space=vmem, size = 0x12000, scoped, tag = 'internal scratch']
  %s0 = inlined_call_operand.vmem [shape: f32[2,8,4], index: 0, kind: input, shape index: {}]
  %s1 = inlined_call_operand.vmem [shape: f32[3,4,128], index: 1, kind: input, shape index: {}]
  %s2 = inlined_call_operand.hbm [shape: f32[2,8,128], index: 2, kind: output, shape index: {}]
  %s3 = sld [smem:[#allocation0]]
  $region41: #{tpu_custom_call.1} parent=0
    _
  %s5 = ssub.s32 1, %s3
  %s6 = scalar_select 0, %s5, %s3
  $region1: #{tpu_custom_call.1} parent=0
    #allocation2 [shape = 'u8[8192]{0}', space=vmem, size = 0x2000, scoped, tag = 'output window, operand 0']
    #allocation3 [shape = 's32[2]{0}', space=sflag, size = 0x8, scoped, tag = 'scoped memory for tpu_custom_call.1']
    %7 = vsyncpa [#allocation3], 0
    %s8 = scalar_lea.sflag [#allocation3], 1
    %9 = vsyncpa %s8, 0
    loop: start=0, step=1, limit=4
    $region2: #{tpu_custom_call.1} parent=1 // loop_pre_header
      _
    $region3: #{tpu_custom_call.1} parent=1 // loop_header
      %s11 = sphi 0, %s15
      %p12 = scmp.ge.s32.totalorder %s11, 4
      %s18 = sphi 0, %s30
      %s19 = sphi 0, %s26
      %s20 = sphi 0, %s18
      %s21 = sphi 0, %s19
      %s22 = sphi 0, %s20
      %s23 = sphi 0, %s21
      %s33 = sphi 0, %s35
      %s36 = sphi 0, %s33
      %s37 = sphi 0, %s36
      %s53 = sphi 0, %s37
      %s59 = sphi 0, %s61
      %s62 = sphi 0, %s59
      %s63 = sphi 0, %s62
      %s79 = sphi 0, %s63
      %s87 = sphi 0, %s89
      %s90 = sphi 0, %s87
      %s91 = sphi 0, %s90
      %s107 = sphi 0, %s91
    $region4: #{tpu_custom_call.1} parent=1 // loop_header_branch
      %14 = sbr.rel (%p12) target = $region8
    $region5: #{tpu_custom_call.1} parent=1 // loop_body
      %s16 = ssub.s32 %s11, 1
      %s17 = ssub.s32 %s11, 2
      %s24 = sadd.s32 1, %s19
      %p25 = scmp.ge.s32.totalorder %s24, 1
      %s26 = scalar_select %p25, 0, %s24
      %s27 = sadd.s32 1, %s18
      %s28 = scalar_select %p25, %s27, %s18
      %p29 = scmp.ge.s32.totalorder %s28, 2
      %s30 = scalar_select %p29, 0, %s28
      %s31 = ssub.s32 %s18, %s30
      %p32 = scmp.eq.s32.totalorder %s31, 0
      %s34 = sadd.s32 %s33, 1
      %s35 = scalar_select %p32, %s33, %s34
      %p38 = pneg %p32
      %p39 = scmp.eq.s32.totalorder %s11, 1
      %p40 = por %p38, %p39
      %p41 = scmp.ne.s32.totalorder %s33, %s36
      %p42 = scmp.eq.s32.totalorder %s11, 0
      %p43 = por %p41, %p42
      %p44 = scmp.ne.s32.totalorder %s33, %s36
      %p45 = scmp.eq.s32.totalorder %s16, 1
      %p46 = por %p44, %p45
      %p47 = scmp.ne.s32.totalorder %s36, %s37
      %p48 = scmp.eq.s32.totalorder %s16, 0
      %p49 = por %p47, %p48
      %p50 = scmp.ne.s32.totalorder %s36, %s37
      %p51 = scmp.eq.s32.totalorder %s17, 1
      %p52 = por %p50, %p51
      %p54 = scmp.ne.s32.totalorder %s37, %s53
      %p55 = scmp.eq.s32.totalorder %s17, 0
      %p56 = por %p54, %p55
      %s57 = ssub.s32 %s19, %s26
      %p58 = scmp.eq.s32.totalorder %s57, 0
      %s60 = sadd.s32 %s59, 1
      %s61 = scalar_select %p58, %s59, %s60
      %p64 = pneg %p58
      %p65 = scmp.eq.s32.totalorder %s11, 1
      %p66 = por %p64, %p65
      %p67 = scmp.ne.s32.totalorder %s59, %s62
      %p68 = scmp.eq.s32.totalorder %s11, 0
      %p69 = por %p67, %p68
      %p70 = scmp.ne.s32.totalorder %s59, %s62
      %p71 = scmp.eq.s32.totalorder %s16, 1
      %p72 = por %p70, %p71
      %p73 = scmp.ne.s32.totalorder %s62, %s63
      %p74 = scmp.eq.s32.totalorder %s16, 0
      %p75 = por %p73, %p74
      %p76 = scmp.ne.s32.totalorder %s62, %s63
      %p77 = scmp.eq.s32.totalorder %s17, 1
      %p78 = por %p76, %p77
      %p80 = scmp.ne.s32.totalorder %s63, %s79
      %p81 = scmp.eq.s32.totalorder %s17, 0
      %p82 = por %p80, %p81
      %s83 = ssub.s32 %s18, %s30
      %s84 = ssub.s32 %s19, %s26
      %s85 = sor.u32 %s83, %s84
      %p86 = scmp.eq.s32.totalorder %s85, 0
      %s88 = sadd.s32 %s87, 1
      %s89 = scalar_select %p86, %s87, %s88
      %p92 = pneg %p86
      %p93 = scmp.eq.s32.totalorder %s11, 1
      %p94 = por %p92, %p93
      %p95 = scmp.ne.s32.totalorder %s87, %s90
      %p96 = scmp.eq.s32.totalorder %s11, 0
      %p97 = por %p95, %p96
      %p98 = scmp.ne.s32.totalorder %s87, %s90
      %p99 = scmp.eq.s32.totalorder %s16, 1
      %p100 = por %p98, %p99
      %p101 = scmp.ne.s32.totalorder %s90, %s91
      %p102 = scmp.eq.s32.totalorder %s16, 0
      %p103 = por %p101, %p102
      %p104 = scmp.ne.s32.totalorder %s90, %s91
      %p105 = scmp.eq.s32.totalorder %s17, 1
      %p106 = por %p104, %p105
      %p108 = scmp.ne.s32.totalorder %s91, %s107
      %p109 = scmp.eq.s32.totalorder %s17, 0
      %p110 = por %p108, %p109
      %p111 = scmp.le.s32.totalorder 1, %s11
      %p112 = scmp.lt.s32.totalorder %s11, 3
      %p113 = pnand %p111, %p112
      %p114 = pneg %p113
      // Predicated region
      $region9: #{tpu_custom_call.1} parent=5 // pred_check
        _
      $region10: #{tpu_custom_call.1} parent=5 // pred_check_branch
        %116 = sbr.rel (%p113) target = $region12
      $region11: #{tpu_custom_call.1} parent=5 // pred_region
        %s117 = ssub.s32 %s11, 1
        // Predicated region
        $region13: #{tpu_custom_call.1} parent=11 // pred_check
          %p118 = pneg %p75
        $region14: #{tpu_custom_call.1} parent=11 // pred_check_branch
          %120 = sbr.rel (%p118) target = $region16
        $region15: #{tpu_custom_call.1} parent=11 // pred_region
          %p121 = scmp.lt.s32.totalorder %s21, 0
          %s122 = scalar_select %p121, %s21, 0
          %s123 = smul.addr %s122, 4
          %s124 = scalar_lea.vmem %s1, %s123
        $region16: #{tpu_custom_call.1} parent=11 // pred_fallthru
          _
      $region12: #{tpu_custom_call.1} parent=5 // pred_fallthru
        _
      %p125 = scmp.lt.s32.totalorder %s11, 2
      // Predicated region
      $region17: #{tpu_custom_call.1} parent=5 // pred_check
        %p126 = pneg %p125
      $region18: #{tpu_custom_call.1} parent=5 // pred_check_branch
        %128 = sbr.rel (%p126) target = $region20
      $region19: #{tpu_custom_call.1} parent=5 // pred_region
        // Predicated region
        $region21: #{tpu_custom_call.1} parent=19 // pred_check
          %p129 = pneg %p43
        $region22: #{tpu_custom_call.1} parent=19 // pred_check_branch
          %131 = sbr.rel (%p129) target = $region24
        $region23: #{tpu_custom_call.1} parent=19 // pred_region
          %p132 = scmp.lt.s32.totalorder %s18, 1
          %s133 = scalar_select %p132, %s18, 1
          %s134 = smul.addr %s133, 8
          %s135 = scalar_lea.vmem %s0, %s134
        $region24: #{tpu_custom_call.1} parent=19 // pred_fallthru
          _
      $region20: #{tpu_custom_call.1} parent=5 // pred_fallthru
        _
      %p136 = scmp.le.s32.totalorder 1, %s11
      %p137 = scmp.lt.s32.totalorder %s11, 3
      %p138 = pnand %p136, %p137
      %p139 = pneg %p138
      // Predicated region
      $region25: #{tpu_custom_call.1} parent=5 // pred_check
        _
      $region26: #{tpu_custom_call.1} parent=5 // pred_check_branch
        %141 = sbr.rel (%p138) target = $region28
      $region27: #{tpu_custom_call.1} parent=5 // pred_region
        %s142 = ssub.s32 %s11, 1
        %p143 = scmp.lt.s32.totalorder %s20, 1
        %s144 = scalar_select %p143, %s20, 1
        %s145 = smul.addr %s144, 8
        %s146 = scalar_lea.vmem %s0, %s145
        %p147 = pneg %p49
        %p148 = pneg %p46
        %p149 = scmp.lt.s32.totalorder %s21, 0
        %s150 = scalar_select %p149, %s21, 0
        %s151 = smul.addr %s150, 4
        %s152 = scalar_lea.vmem %s1, %s151
        %p153 = pneg %p75
        %p154 = pneg %p72
        %p155 = pneg %p103
        %p156 = pneg %p100
        %s157 = sand.u32 %s90, 1
        %s158 = scalar_lea.sflag [#allocation3], %s157
        %s159 = sand.u32 %s90, 1
        %s160 = smul.addr %s159, 8
        %s161 = scalar_lea.vmem [#allocation2], %s160
        %p162 = scmp.lt.s32.totalorder %s20, 1
        %s163 = scalar_select %p162, %s20, 1
        %s164 = smul.addr %s163, 8
        %s165 = scalar_lea.vmem %s0, %s164
        %p166 = scmp.lt.s32.totalorder %s21, 0
        %s167 = scalar_select %p166, %s21, 0
        %s168 = smul.addr %s167, 4
        %s169 = scalar_lea.vmem %s1, %s168
        %v170 = vld [vmem:[%s165] sm:$0xff]
        %v171 = vrot.slane %v170, 7
        %v172 = vrot.slane %v170, 1
        %v173 = vld [vmem:[%s169] sm:$0xf]
        %s174 = scalar_lea.vmem %s169, 4
        %v175 = vld [vmem:[%s174] sm:$0xf]
        %vm176 = vcmask 31744
        %v178 = vsel %vm176, %v170, 0
        %vm180 = vcmask 1043456
        %v182 = vsel %vm180, %v175, 0
        %184 = vmatprep.subr.mxu0 0.0
        %185 = vmatpush1.msra.mxu0 %v182
        %186 = vmatprep.subr.mxu0 0.0
        %187 = vmatpush1.msra.mxu0 0.0
        %188 = vmatprep.subr.mxu0 0.0
        %189 = vmatpush1.msra.mxu0 0.0
        %190 = vmatprep.subr.mxu0 0.0
        %191 = vmatpush1.msra.mxu0 0.0
        %192 = vmatprep.subr.mxu0 0.0
        %193 = vmatpush1.msra.mxu0 0.0
        %194 = vmatprep.subr.mxu0 0.0
        %195 = vmatpush1.msra.mxu0 0.0
        %196 = vmatprep.subr.mxu0 0.0
        %197 = vmatpush1.msra.mxu0 0.0
        %198 = vmatprep.subr.mxu0 0.0
        %199 = vmatpush1.msra.mxu0 0.0
        %200 = vmatprep.subr.mxu0 0.0
        %201 = vmatpush1.msra.mxu0 0.0
        %202 = vmatprep.subr.mxu0 0.0
        %203 = vmatpush1.msra.mxu0 0.0
        %204 = vmatprep.subr.mxu0 0.0
        %205 = vmatpush1.msra.mxu0 0.0
        %206 = vmatprep.subr.mxu0 0.0
        %207 = vmatpush1.msra.mxu0 0.0
        %208 = vmatprep.subr.mxu0 0.0
        %209 = vmatpush1.msra.mxu0 0.0
        %210 = vmatprep.subr.mxu0 0.0
        %211 = vmatpush1.msra.mxu0 0.0
        %212 = vmatprep.subr.mxu0 0.0
        %213 = vmatpush1.msra.mxu0 0.0
        %214 = vmatprep.subr.mxu0 0.0
        %215 = vmatpush1.msra.mxu0 0.0
        %216 = vmatprep.subr.mxu0 0.0
        %217 = vmatpush1.msra.mxu0 0.0
        %218 = vmatprep.subr.mxu0 0.0
        %219 = vmatpush1.msra.mxu0 0.0
        %220 = vmatprep.subr.mxu0 0.0
        %221 = vmatpush1.msra.mxu0 0.0
        %222 = vmatprep.subr.mxu0 0.0
        %223 = vmatpush1.msra.mxu0 0.0
        %224 = vmatprep.subr.mxu0 0.0
        %225 = vmatpush1.msra.mxu0 0.0
        %226 = vmatprep.subr.mxu0 0.0
        %227 = vmatpush1.msra.mxu0 0.0
        %228 = vmatprep.subr.mxu0 0.0
        %229 = vmatpush1.msra.mxu0 0.0
        %230 = vmatprep.subr.mxu0 0.0
        %231 = vmatpush1.msra.mxu0 0.0
        %232 = vmatprep.subr.mxu0 0.0
        %233 = vmatpush1.msra.mxu0 0.0
        %234 = vmatprep.subr.mxu0 0.0
        %235 = vmatpush1.msra.mxu0 0.0
        %236 = vmatprep.subr.mxu0 0.0
        %237 = vmatpush1.msra.mxu0 0.0
        %238 = vmatprep.subr.mxu0 0.0
        %239 = vmatpush1.msra.mxu0 0.0
        %240 = vmatprep.subr.mxu0 0.0
        %241 = vmatpush1.msra.mxu0 0.0
        %242 = vmatprep.subr.mxu0 0.0
        %243 = vmatpush1.msra.mxu0 0.0
        %244 = vmatprep.subr.mxu0 0.0
        %245 = vmatpush1.msra.mxu0 0.0
        %246 = vmatprep.subr.mxu0 0.0
        %247 = vmatpush1.msra.mxu0 0.0
        %248 = vmatprep.mubr.f32.mxu0 0.0
        %249 = vmatmul.mubr.f32.gmra.mrb[0].mxu0 %v178
        %v250 = vpop.f32.mrb[0].mxu0
        %v251 = vadd.f32 0.0, %v250
        %v252 = vpop.f32.mrb[0].mxu0
        %253 = vdwg.mxu0
        %v255 = vsel %vm176, %v171, 0
        %v258 = vsel %vm180, %v173, 0
        %260 = vmatprep.subr.mxu0 0.0
        %261 = vmatpush1.msra.mxu0 %v258
        %262 = vmatprep.subr.mxu0 0.0
        %263 = vmatpush1.msra.mxu0 0.0
        %264 = vmatprep.subr.mxu0 0.0
        %265 = vmatpush1.msra.mxu0 0.0
        %266 = vmatprep.subr.mxu0 0.0
        %267 = vmatpush1.msra.mxu0 0.0
        %268 = vmatprep.subr.mxu0 0.0
        %269 = vmatpush1.msra.mxu0 0.0
        %270 = vmatprep.subr.mxu0 0.0
        %271 = vmatpush1.msra.mxu0 0.0
        %272 = vmatprep.subr.mxu0 0.0
        %273 = vmatpush1.msra.mxu0 0.0
        %274 = vmatprep.subr.mxu0 0.0
        %275 = vmatpush1.msra.mxu0 0.0
        %276 = vmatprep.subr.mxu0 0.0
        %277 = vmatpush1.msra.mxu0 0.0
        %278 = vmatprep.subr.mxu0 0.0
        %279 = vmatpush1.msra.mxu0 0.0
        %280 = vmatprep.subr.mxu0 0.0
        %281 = vmatpush1.msra.mxu0 0.0
        %282 = vmatprep.subr.mxu0 0.0
        %283 = vmatpush1.msra.mxu0 0.0
        %284 = vmatprep.subr.mxu0 0.0
        %285 = vmatpush1.msra.mxu0 0.0
        %286 = vmatprep.subr.mxu0 0.0
        %287 = vmatpush1.msra.mxu0 0.0
        %288 = vmatprep.subr.mxu0 0.0
        %289 = vmatpush1.msra.mxu0 0.0
        %290 = vmatprep.subr.mxu0 0.0
        %291 = vmatpush1.msra.mxu0 0.0
        %292 = vmatprep.subr.mxu0 0.0
        %293 = vmatpush1.msra.mxu0 0.0
        %294 = vmatprep.subr.mxu0 0.0
        %295 = vmatpush1.msra.mxu0 0.0
        %296 = vmatprep.subr.mxu0 0.0
        %297 = vmatpush1.msra.mxu0 0.0
        %298 = vmatprep.subr.mxu0 0.0
        %299 = vmatpush1.msra.mxu0 0.0
        %300 = vmatprep.subr.mxu0 0.0
        %301 = vmatpush1.msra.mxu0 0.0
        %302 = vmatprep.subr.mxu0 0.0
        %303 = vmatpush1.msra.mxu0 0.0
        %304 = vmatprep.subr.mxu0 0.0
        %305 = vmatpush1.msra.mxu0 0.0
        %306 = vmatprep.subr.mxu0 0.0
        %307 = vmatpush1.msra.mxu0 0.0
        %308 = vmatprep.subr.mxu0 0.0
        %309 = vmatpush1.msra.mxu0 0.0
        %310 = vmatprep.subr.mxu0 0.0
        %311 = vmatpush1.msra.mxu0 0.0
        %312 = vmatprep.subr.mxu0 0.0
        %313 = vmatpush1.msra.mxu0 0.0
        %314 = vmatprep.subr.mxu0 0.0
        %315 = vmatpush1.msra.mxu0 0.0
        %316 = vmatprep.subr.mxu0 0.0
        %317 = vmatpush1.msra.mxu0 0.0
        %318 = vmatprep.subr.mxu0 0.0
        %319 = vmatpush1.msra.mxu0 0.0
        %320 = vmatprep.subr.mxu0 0.0
        %321 = vmatpush1.msra.mxu0 0.0
        %322 = vmatprep.subr.mxu0 0.0
        %323 = vmatpush1.msra.mxu0 0.0
        %324 = vmatprep.mubr.f32.mxu0 0.0
        %325 = vmatmul.mubr.f32.gmra.mrb[0].mxu0 %v255
        %v326 = vpop.f32.mrb[0].mxu0
        %v327 = vadd.f32 %v251, %v326
        %v328 = vpop.f32.mrb[0].mxu0
        %329 = vdwg.mxu0
        %s330 = scalar_lea.vmem %s169, 8
        %v331 = vld [vmem:[%s330] sm:$0xf]
        %v333 = vsel %vm176, %v172, 0
        %v336 = vsel %vm180, %v331, 0
        %338 = vmatprep.subr.mxu0 0.0
        %339 = vmatpush1.msra.mxu0 %v336
        %340 = vmatprep.subr.mxu0 0.0
        %341 = vmatpush1.msra.mxu0 0.0
        %342 = vmatprep.subr.mxu0 0.0
        %343 = vmatpush1.msra.mxu0 0.0
        %344 = vmatprep.subr.mxu0 0.0
        %345 = vmatpush1.msra.mxu0 0.0
        %346 = vmatprep.subr.mxu0 0.0
        %347 = vmatpush1.msra.mxu0 0.0
        %348 = vmatprep.subr.mxu0 0.0
        %349 = vmatpush1.msra.mxu0 0.0
        %350 = vmatprep.subr.mxu0 0.0
        %351 = vmatpush1.msra.mxu0 0.0
        %352 = vmatprep.subr.mxu0 0.0
        %353 = vmatpush1.msra.mxu0 0.0
        %354 = vmatprep.subr.mxu0 0.0
        %355 = vmatpush1.msra.mxu0 0.0
        %356 = vmatprep.subr.mxu0 0.0
        %357 = vmatpush1.msra.mxu0 0.0
        %358 = vmatprep.subr.mxu0 0.0
        %359 = vmatpush1.msra.mxu0 0.0
        %360 = vmatprep.subr.mxu0 0.0
        %361 = vmatpush1.msra.mxu0 0.0
        %362 = vmatprep.subr.mxu0 0.0
        %363 = vmatpush1.msra.mxu0 0.0
        %364 = vmatprep.subr.mxu0 0.0
        %365 = vmatpush1.msra.mxu0 0.0
        %366 = vmatprep.subr.mxu0 0.0
        %367 = vmatpush1.msra.mxu0 0.0
        %368 = vmatprep.subr.mxu0 0.0
        %369 = vmatpush1.msra.mxu0 0.0
        %370 = vmatprep.subr.mxu0 0.0
        %371 = vmatpush1.msra.mxu0 0.0
        %372 = vmatprep.subr.mxu0 0.0
        %373 = vmatpush1.msra.mxu0 0.0
        %374 = vmatprep.subr.mxu0 0.0
        %375 = vmatpush1.msra.mxu0 0.0
        %376 = vmatprep.subr.mxu0 0.0
        %377 = vmatpush1.msra.mxu0 0.0
        %378 = vmatprep.subr.mxu0 0.0
        %379 = vmatpush1.msra.mxu0 0.0
        %380 = vmatprep.subr.mxu0 0.0
        %381 = vmatpush1.msra.mxu0 0.0
        %382 = vmatprep.subr.mxu0 0.0
        %383 = vmatpush1.msra.mxu0 0.0
        %384 = vmatprep.subr.mxu0 0.0
        %385 = vmatpush1.msra.mxu0 0.0
        %386 = vmatprep.subr.mxu0 0.0
        %387 = vmatpush1.msra.mxu0 0.0
        %388 = vmatprep.subr.mxu0 0.0
        %389 = vmatpush1.msra.mxu0 0.0
        %390 = vmatprep.subr.mxu0 0.0
        %391 = vmatpush1.msra.mxu0 0.0
        %392 = vmatprep.subr.mxu0 0.0
        %393 = vmatpush1.msra.mxu0 0.0
        %394 = vmatprep.subr.mxu0 0.0
        %395 = vmatpush1.msra.mxu0 0.0
        %396 = vmatprep.subr.mxu0 0.0
        %397 = vmatpush1.msra.mxu0 0.0
        %398 = vmatprep.subr.mxu0 0.0
        %399 = vmatpush1.msra.mxu0 0.0
        %400 = vmatprep.subr.mxu0 0.0
        %401 = vmatpush1.msra.mxu0 0.0
        %402 = vmatprep.mubr.f32.mxu0 0.0
        %403 = vmatmul.mubr.f32.gmra.mrb[0].mxu0 %v333
        %v404 = vpop.f32.mrb[0].mxu0
        %v405 = vadd.f32 0.0, %v404
        %v406 = vpop.f32.mrb[0].mxu0
        %407 = vdwg.mxu0
        %v408 = vadd.f32 %v327, %v405
        %409 = vst [vmem:[%s161] sm:$0xff] %v408
        %s410 = sand.u32 %s90, 1
        %s411 = scalar_lea.sflag [#allocation3], %s410
        %s412 = sand.u32 %s90, 1
        %s413 = smul.addr %s412, 8
        %s414 = scalar_lea.vmem [#allocation2], %s413
        // Predicated region
        $region29: #{tpu_custom_call.1} parent=27 // pred_check
          %p415 = pneg %p100
        $region30: #{tpu_custom_call.1} parent=27 // pred_check_branch
          %417 = sbr.rel (%p415) target = $region32
        $region31: #{tpu_custom_call.1} parent=27 // pred_region
          %s419 = ssub.s32 128, 128
          %420 = vsyncadd %s411, %s419
          %s421 = sadd.s32 %s21, %s20
          %s422 = smul.addr %s421, 128
          %s423 = scalar_lea.hbm %s2, %s422
          %s425 = sshll.u32 %s414, 4
          %s426 = int_to_ptr.vmem [resolvable:$true] %s425
          %428 = dma.vmem_to_hbm [thread:$0]  %s426, 128, %s423, %s411
        $region32: #{tpu_custom_call.1} parent=27 // pred_fallthru
          _
      $region28: #{tpu_custom_call.1} parent=5 // pred_fallthru
        _
      %p429 = scmp.le.s32.totalorder 2, %s11
      // Predicated region
      $region33: #{tpu_custom_call.1} parent=5 // pred_check
        %p430 = pneg %p429
      $region34: #{tpu_custom_call.1} parent=5 // pred_check_branch
        %432 = sbr.rel (%p430) target = $region36
      $region35: #{tpu_custom_call.1} parent=5 // pred_region
        %s433 = ssub.s32 %s11, 2
        // Predicated region
        $region37: #{tpu_custom_call.1} parent=35 // pred_check
          %p434 = pneg %p106
        $region38: #{tpu_custom_call.1} parent=35 // pred_check_branch
          %436 = sbr.rel (%p434) target = $region40
        $region39: #{tpu_custom_call.1} parent=35 // pred_region
          %s437 = sand.u32 %s91, 1
          %s438 = scalar_lea.sflag [#allocation3], %s437
          %s439 = sand.u32 %s91, 1
          %s440 = smul.addr %s439, 8
          %s441 = scalar_lea.vmem [#allocation2], %s440
          %442 = dma.done %s438, 128
        $region40: #{tpu_custom_call.1} parent=35 // pred_fallthru
          _
      $region36: #{tpu_custom_call.1} parent=5 // pred_fallthru
        _
    $region6: #{tpu_custom_call.1} parent=1 // loop_footer
      %s15 = sadd.s32 1, %s11
    $region7: #{tpu_custom_call.1} parent=1 // loop_footer_branch
      %10 = sbr.rel target = $region3
    $region8: #{tpu_custom_call.1} parent=1 // loop_exit
      _
    %443 = vsyncpa [#allocation3], 1
    %s444 = scalar_lea.sflag [#allocation3], 1
    %445 = vsyncpa %s444, 1

</llo_original>
